<compile_context>
chip_gen: v5e
topology: v5e:2x2
jax: 0.10.0
libtpu: 0.0.40
codegen_flags: <defaults>
</compile_context>

<pallas_src>
import functools

import jax
import jax.numpy as jnp
from jax.experimental import pallas as pl
from jax.experimental.pallas import tpu as pltpu

BN_EPS = 1e-5


def _round_up(n: int, m: int) -> int:
    return -(-n // m) * m


# ---------------------------------------------------------------------------
# Kernel: whole network fused, single grid point, everything VMEM resident.
# ---------------------------------------------------------------------------
def _critic_kernel(x_ref, p_ref, o_ref, *, cross_q: bool, num_layers: int, fwp: int):
    """x_ref: (B, FWP) padded concat(state, action); p_ref: packed params.

    Packed-buffer layout (all rows are FWP lanes wide, zero padded):
      rows [l*FWP, (l+1)*FWP)            : weight block of hidden layer l
      rows [num_layers*FWP, ...)         : per-layer [gamma, beta,] bias rows,
                                           then head-weight row, head-bias row.
    """
    h = x_ref[...]                                     # (B, FWP) f32
    vrow = num_layers * fwp                            # start of the vector rows

    for li in range(num_layers):
        if cross_q:
            # Plain (1, FWP) row loads; broadcast happens in the VPU add/mul.
            gamma = p_ref[vrow:vrow + 1, :]
            beta = p_ref[vrow + 1:vrow + 2, :]
            vrow += 2
            mean = jnp.mean(h, axis=0, keepdims=True)
            var = jnp.maximum(
                jnp.mean(h * h, axis=0, keepdims=True) - mean * mean, 0.0)
            scale = gamma * jax.lax.rsqrt(var + BN_EPS)
            h = h * scale + (beta - mean * scale)
        # 8-aligned, full-width weight block (pad rows/cols are zero).
        w = p_ref[li * fwp:(li + 1) * fwp, :]           # (FWP, FWP)
        b = p_ref[vrow:vrow + 1, :]                     # (1, FWP)
        vrow += 1
        h = jnp.maximum(
            jnp.dot(h, w, preferred_element_type=jnp.float32) + b, 0.0)

    # Head: (1, FWP) x (B, FWP) contracted over features -> lane-dense (1, B).
    w_head = p_ref[vrow:vrow + 1, :]                    # (1, FWP)
    b_head = p_ref[vrow + 1:vrow + 2, 0:1]              # (1, 1)
    q = jax.lax.dot_general(
        w_head, h, (((1,), (1,)), ((), ())),
        preferred_element_type=jnp.float32)             # (1, B)
    o_ref[...] = q + b_head


# ---------------------------------------------------------------------------
# One-time parameter packing (done at build time, NOT per forward call).
# ---------------------------------------------------------------------------
def _pack_params(params, *, cross_q, num_hidden_layers, fwp):
    def pad2(x, rows, cols):
        x = jnp.asarray(x, jnp.float32)
        return jnp.pad(x, ((0, rows - x.shape[0]), (0, cols - x.shape[1])))

    wblocks, vrows = [], []
    idx = 0
    for _ in range(num_hidden_layers):
        if cross_q:
            gamma, beta = params[idx], params[idx + 1]
            idx += 2
            vrows.append(pad2(jnp.reshape(gamma, (1, -1)), 1, fwp))
            vrows.append(pad2(jnp.reshape(beta, (1, -1)), 1, fwp))
        w, b = params[idx], params[idx + 1]
        idx += 2
        wblocks.append(pad2(w, fwp, fwp))               # (FWP, FWP) zero padded
        vrows.append(pad2(jnp.reshape(b, (1, -1)), 1, fwp))
    w_head, b_head = params[idx], params[idx + 1]
    vrows.append(pad2(jnp.reshape(w_head, (1, -1)), 1, fwp))   # (1, H) head row
    vrows.append(pad2(jnp.reshape(b_head, (1, -1)), 1, fwp))   # head bias
    return jnp.concatenate(wblocks + vrows, axis=0)


def make_critic_forward(params, *, state_size: int, action_size: int,
                        cross_q: bool, num_hidden_layers: int):
    """Packs parameters once and returns a jitted forward(state, action)->(B,1)."""
    hidden_size = (params[2] if cross_q else params[0]).shape[1]
    in0 = state_size + action_size
    fwp = _round_up(max(in0, hidden_size), 8)

    pbuf = _pack_params(params, cross_q=cross_q,
                        num_hidden_layers=num_hidden_layers, fwp=fwp)

    kernel = functools.partial(_critic_kernel, cross_q=cross_q,
                               num_layers=num_hidden_layers, fwp=fwp)

    @jax.jit
    def forward(state, action):
        x = jnp.concatenate([state, action], axis=1).astype(jnp.float32)
        batch = x.shape[0]
        x = jnp.pad(x, ((0, 0), (0, fwp - in0)))        # (B, FWP), fuses under jit
        # Whole problem is tiny -> single grid point, 2 input DMAs total.
        q = pl.pallas_call(
            kernel,
            out_shape=jax.ShapeDtypeStruct((1, batch), jnp.float32),
            in_specs=[pl.BlockSpec(memory_space=pltpu.MemorySpace.VMEM)] * 2,
            out_specs=pl.BlockSpec(memory_space=pltpu.MemorySpace.VMEM),
        )(x, pbuf)
        return q.T                                       # (B, 1) as in the module

    return forward


# ---------------------------------------------------------------------------
# Deterministic parameter construction (matches PyTorch default init ranges).
# ---------------------------------------------------------------------------
def _linear_params(key, fan_in, fan_out):
    kw, kb = jax.random.split(key)
    bound = 1.0 / jnp.sqrt(jnp.float32(fan_in))
    w = jax.random.uniform(kw, (fan_in, fan_out), jnp.float32, -bound, bound)
    b = jax.random.uniform(kb, (1, fan_out), jnp.float32, -bound, bound)
    return w, b


def make_critic_params(key, state_size, action_size, hidden_size, num_layers, cross_q):
    in_dim = state_size + action_size
    params = []
    if cross_q:
        dims = [in_dim] + [hidden_size] * num_layers
        for i in range(num_layers):
            f_in, f_out = dims[i], dims[i + 1]
            params.append(jnp.ones((1, f_in), jnp.float32))    # BN gamma
            params.append(jnp.zeros((1, f_in), jnp.float32))   # BN beta
            key, sub = jax.random.split(key)
            w, b = _linear_params(sub, f_in, f_out)
            params += [w, b]
        key, sub = jax.random.split(key)
        w, b = _linear_params(sub, hidden_size, 1)
        params += [w, b]
        n_hidden = num_layers
    else:
        key, k1 = jax.random.split(key)
        key, k2 = jax.random.split(key)
        key, k3 = jax.random.split(key)
        w1, b1 = _linear_params(k1, in_dim, hidden_size)
        w2, b2 = _linear_params(k2, hidden_size, hidden_size)
        w3, b3 = _linear_params(k3, hidden_size, 1)
        params = [w1, b1, w2, b2, w3, b3]
        n_hidden = 2
    return params, n_hidden


# ---------------------------------------------------------------------------
# Pure-JAX reference (textbook BN form) for a sanity check of the kernel.
# ---------------------------------------------------------------------------
def critic_reference(state, action, params, *, cross_q, num_hidden_layers):
    h = jnp.concatenate([state, action], axis=1).astype(jnp.float32)
    idx = 0
    for _ in range(num_hidden_layers):
        if cross_q:
            gamma, beta = params[idx], params[idx + 1]
            idx += 2
            mean = jnp.mean(h, axis=0, keepdims=True)
            var = jnp.mean((h - mean) ** 2, axis=0, keepdims=True)
            h = (h - mean) * jax.lax.rsqrt(var + BN_EPS) * gamma + beta
        w, b = params[idx], params[idx + 1]
        idx += 2
        h = jnp.maximum(h @ w + b, 0.0)
    w, b = params[idx], params[idx + 1]
    return h @ w + b


if __name__ == "__main__":
    key = jax.random.PRNGKey(0)

    state_size, action_size, hidden_size = 12, 4, 32
    num_layers = 2
    batch = 8

    k_state, k_action, k_params = jax.random.split(key, 3)
    state = jax.random.normal(k_state, (batch, state_size), jnp.float32)
    action = jax.random.normal(k_action, (batch, action_size), jnp.float32)

    ok = True
    for cross_q in (False, True):
        params, n_hidden = make_critic_params(
            k_params, state_size, action_size, hidden_size, num_layers, cross_q
        )
        forward = make_critic_forward(
            params, state_size=state_size, action_size=action_size,
            cross_q=cross_q, num_hidden_layers=n_hidden
        )
        q = jax.block_until_ready(forward(state, action))
        q_ref = critic_reference(
            state, action, params, cross_q=cross_q, num_hidden_layers=n_hidden
        )
        assert q.shape == (batch, 1)
        if not jnp.allclose(q, q_ref, atol=1e-4, rtol=1e-4):
            ok = False

    if ok:
        print("KERNEL_OK")
</pallas_src>

<mosaic_0001>
module attributes {stable_mosaic.version = 11 : i64} {
  func.func @_critic_kernel(%arg0: memref<8x32xf32, #tpu.memory_space<vmem>>, %arg1: memref<68x32xf32, #tpu.memory_space<vmem>>, %arg2: memref<1x8xf32, #tpu.memory_space<vmem>>) attributes {dimension_semantics = [], scalar_prefetch = 0 : i64, scratch_operands = 0 : i64, tpu.core_type = #tpu.core_type<tc>} {
    %c0 = arith.constant 0 : index
    %c0_0 = arith.constant 0 : index
    %0 = vector.load %arg0[%c0, %c0_0] : memref<8x32xf32, #tpu.memory_space<vmem>>, vector<8x32xf32>
    %c0_1 = arith.constant 0 : index
    %c0_2 = arith.constant 0 : index
    %1 = vector.load %arg1[%c0_1, %c0_2] : memref<68x32xf32, #tpu.memory_space<vmem>>, vector<32x32xf32>
    %c64 = arith.constant 64 : index
    %c0_3 = arith.constant 0 : index
    %2 = vector.load %arg1[%c64, %c0_3] : memref<68x32xf32, #tpu.memory_space<vmem>>, vector<1x32xf32>
    %cst = arith.constant dense<0.000000e+00> : vector<8x32xf32>
    %3 = tpu.matmul %0, %1, %cst {dimension_numbers = #tpu.dot_dimension_numbers<[1], [0], [0], [1], [0, 0, 1, 1], [], []>} : vector<8x32xf32>, vector<32x32xf32>, vector<8x32xf32> -> vector<8x32xf32>
    %4 = vector.broadcast %2 : vector<1x32xf32> to vector<8x32xf32>
    %5 = arith.addf %3, %4 : vector<8x32xf32>
    %cst_4 = arith.constant 0.000000e+00 : f32
    %6 = vector.broadcast %cst_4 : f32 to vector<8x32xf32>
    %7 = arith.maximumf %5, %6 : vector<8x32xf32>
    %c32 = arith.constant 32 : index
    %c0_5 = arith.constant 0 : index
    %8 = vector.load %arg1[%c32, %c0_5] : memref<68x32xf32, #tpu.memory_space<vmem>>, vector<32x32xf32>
    %c65 = arith.constant 65 : index
    %c0_6 = arith.constant 0 : index
    %9 = vector.load %arg1[%c65, %c0_6] : memref<68x32xf32, #tpu.memory_space<vmem>>, vector<1x32xf32>
    %cst_7 = arith.constant dense<0.000000e+00> : vector<8x32xf32>
    %10 = tpu.matmul %7, %8, %cst_7 {dimension_numbers = #tpu.dot_dimension_numbers<[1], [0], [0], [1], [0, 0, 1, 1], [], []>} : vector<8x32xf32>, vector<32x32xf32>, vector<8x32xf32> -> vector<8x32xf32>
    %11 = vector.broadcast %9 : vector<1x32xf32> to vector<8x32xf32>
    %12 = arith.addf %10, %11 : vector<8x32xf32>
    %cst_8 = arith.constant 0.000000e+00 : f32
    %13 = vector.broadcast %cst_8 : f32 to vector<8x32xf32>
    %14 = arith.maximumf %12, %13 : vector<8x32xf32>
    %c66 = arith.constant 66 : index
    %c0_9 = arith.constant 0 : index
    %15 = vector.load %arg1[%c66, %c0_9] : memref<68x32xf32, #tpu.memory_space<vmem>>, vector<1x32xf32>
    %c67 = arith.constant 67 : index
    %c0_10 = arith.constant 0 : index
    %16 = vector.load %arg1[%c67, %c0_10] : memref<68x32xf32, #tpu.memory_space<vmem>>, vector<1x1xf32>
    %cst_11 = arith.constant dense<0.000000e+00> : vector<1x8xf32>
    %17 = tpu.matmul %15, %14, %cst_11 {dimension_numbers = #tpu.dot_dimension_numbers<[1], [1], [0], [0], [0, 0, 1, 0], [], []>} : vector<1x32xf32>, vector<8x32xf32>, vector<1x8xf32> -> vector<1x8xf32>
    %18 = vector.broadcast %16 : vector<1x1xf32> to vector<1x8xf32>
    %19 = arith.addf %17, %18 : vector<1x8xf32>
    %c0_12 = arith.constant 0 : index
    %c0_13 = arith.constant 0 : index
    %20 = vector.load %arg2[%c0_12, %c0_13] : memref<1x8xf32, #tpu.memory_space<vmem>>, vector<1x8xf32>
    tpu.vector_store %arg2[%c0_12, %c0_13], %19 {strides = array<i32>} : memref<1x8xf32, #tpu.memory_space<vmem>>, vector<1x8xf32>,
    return
  }
}

</mosaic_0001>

<llo_original>
// kernel: forward.1
$region0: #{forward.1}
  #allocation0 [shape = 'u32[]', space=smem, size = 0x4, offset = 0x4, fixed_abs, tag = 'smem constant byte address 0x4 - core index']
  #allocation1 [shape = 'u32[72,128]{1,0:T(1,128)}', space=vmem, size = 0x9000, scoped, tag = 'internal scratch']
  %s0 = inlined_call_operand.vmem [shape: f32[8,32], index: 0, kind: input, shape index: {}]
  %s1 = inlined_call_operand.hbm [shape: f32[68,32], index: 1, kind: input, shape index: {}]
  %s2 = inlined_call_operand.hbm [shape: f32[1,8], index: 2, kind: output, shape index: {}]
  %s3 = sld [smem:[#allocation0]]
  $region22: #{forward.1} parent=0
    _
  %s5 = ssub.s32 1, %s3
  %s6 = scalar_select 0, %s5, %s3
  $region1: #{forward.1} parent=0
    #allocation2 [shape = 'u8[36864]{0}', space=vmem, size = 0x9000, scoped, tag = 'input window, operand 1, single buffered']
    #allocation3 [shape = 's32[1]{0}', space=sflag, size = 0x4, scoped, tag = 'scoped memory for forward.1']
    #allocation4 [shape = 's32[1]{0}', space=sflag, size = 0x4, scoped, tag = 'scoped memory for forward.1']
    #allocation5 [shape = 'u8[512]{0}', space=vmem, size = 0x400, scoped, tag = 'output window, operand 0, single buffered']
    %7 = vsyncpa [#allocation3], 0
    %8 = vsyncpa [#allocation4], 0
    // Predicated region
    $region2: #{forward.1} parent=1 // pred_check
      _
    $region3: #{forward.1} parent=1 // pred_check_branch
      %10 = sbr.rel (0) target = $region5
    $region4: #{forward.1} parent=1 // pred_region
      _
    $region5: #{forward.1} parent=1 // pred_fallthru
      _
    // Predicated region
    $region6: #{forward.1} parent=1 // pred_check
      _
    $region7: #{forward.1} parent=1 // pred_check_branch
      %12 = sbr.rel (0) target = $region9
    $region8: #{forward.1} parent=1 // pred_region
      %14 = vsyncadd [#allocation3], 0
      %s15 = sshll.u32 %s1, 4
      %s16 = int_to_ptr.hbm [resolvable:$true] %s15
      %s17 = sshll.u32 [#allocation2], 4
      %s18 = int_to_ptr.vmem [resolvable:$true] %s17
      %23 = dma.hbm_to_vmem [thread:$0]  %s16, 1152, %s18, [#allocation3], 128, 128, 8
    $region9: #{forward.1} parent=1 // pred_fallthru
      _
    // Predicated region
    $region10: #{forward.1} parent=1 // pred_check
      _
    $region11: #{forward.1} parent=1 // pred_check_branch
      %25 = sbr.rel (0) target = $region13
    $region12: #{forward.1} parent=1 // pred_region
      %27 = dma.done [#allocation3], 1152
    $region13: #{forward.1} parent=1 // pred_fallthru
      _
    %v28 = vld [vmem:[%s0] sm:$0xff]
    %v29 = vld [vmem:[#allocation2] sm:$0xff]
    %v30 = vld [vmem:[#allocation2 + $0x8] sm:$0xff]
    %v31 = vld [vmem:[#allocation2 + $0x10] sm:$0xff]
    %v32 = vld [vmem:[#allocation2 + $0x18] sm:$0xff]
    %v33 = vld [vmem:[#allocation2 + $0x40] sm:$0x1]
    %v34 = vperm.slane %v33, 0
    %vm35 = vcmask 261120
    %v37 = vsel %vm35, %v28, 0
    %39 = vmatpush.msra.mxu0 0.0
    %40 = vmatpush.msra.mxu0 0.0
    %41 = vmatpush.msra.mxu0 0.0
    %42 = vmatpush.msra.mxu0 0.0
    %43 = vmatpush.msra.mxu0 0.0
    %44 = vmatpush.msra.mxu0 0.0
    %45 = vmatpush.msra.mxu0 0.0
    %46 = vmatpush.msra.mxu0 0.0
    %47 = vmatpush.msra.mxu0 0.0
    %48 = vmatpush.msra.mxu0 0.0
    %49 = vmatpush.msra.mxu0 0.0
    %50 = vmatpush.msra.mxu0 0.0
    %51 = vmatpush.msra.mxu0 %v32
    %52 = vmatpush.msra.mxu0 %v31
    %53 = vmatpush.msra.mxu0 %v30
    %54 = vmatpush.msra.mxu0 %v29
    %55 = vmatmul.f32.gmra.mxu0 %v37
    %v56 = vpop.f32.mrf.mxu0
    %v57 = vadd.f32 %v34, %v56
    %58 = vdwg.mxu0
    %v59 = vmax.f32 %v57, 0.0
    %v60 = vld [vmem:[#allocation2 + $0x20] sm:$0xff]
    %v61 = vld [vmem:[#allocation2 + $0x28] sm:$0xff]
    %v62 = vld [vmem:[#allocation2 + $0x30] sm:$0xff]
    %v63 = vld [vmem:[#allocation2 + $0x38] sm:$0xff]
    %v64 = vld [vmem:[#allocation2 + $0x41] sm:$0x1]
    %v65 = vperm.slane %v64, 0
    %v67 = vsel %vm35, %v59, 0
    %69 = vmatpush.msra.mxu0 0.0
    %70 = vmatpush.msra.mxu0 0.0
    %71 = vmatpush.msra.mxu0 0.0
    %72 = vmatpush.msra.mxu0 0.0
    %73 = vmatpush.msra.mxu0 0.0
    %74 = vmatpush.msra.mxu0 0.0
    %75 = vmatpush.msra.mxu0 0.0
    %76 = vmatpush.msra.mxu0 0.0
    %77 = vmatpush.msra.mxu0 0.0
    %78 = vmatpush.msra.mxu0 0.0
    %79 = vmatpush.msra.mxu0 0.0
    %80 = vmatpush.msra.mxu0 0.0
    %81 = vmatpush.msra.mxu0 %v63
    %82 = vmatpush.msra.mxu0 %v62
    %83 = vmatpush.msra.mxu0 %v61
    %84 = vmatpush.msra.mxu0 %v60
    %85 = vmatmul.f32.gmra.mxu0 %v67
    %v86 = vpop.f32.mrf.mxu0
    %v87 = vadd.f32 %v65, %v86
    %88 = vdwg.mxu0
    %v89 = vmax.f32 %v87, 0.0
    %v90 = vld [vmem:[#allocation2 + $0x42] sm:$0x1]
    %v91 = vld [vmem:[#allocation2 + $0x43] sm:$0x1]
    %93 = vset.pattern.permute.xlu0 0
    %94 = vperm.xlu0 %93, %v91
    %v95 = vpop.permute.xlu0 %94
    %v98 = vsel %vm35, %v90, 0
    %v101 = vsel %vm35, %v89, 0
    %103 = vmatpush.xpose.msra.mxu0 0.0
    %104 = vmatpush.xpose.msra.mxu0 0.0
    %105 = vmatpush.xpose.msra.mxu0 0.0
    %106 = vmatpush.xpose.msra.mxu0 0.0
    %107 = vmatpush.xpose.msra.mxu0 0.0
    %108 = vmatpush.xpose.msra.mxu0 0.0
    %109 = vmatpush.xpose.msra.mxu0 0.0
    %110 = vmatpush.xpose.msra.mxu0 0.0
    %111 = vmatpush.xpose.msra.mxu0 0.0
    %112 = vmatpush.xpose.msra.mxu0 0.0
    %113 = vmatpush.xpose.msra.mxu0 0.0
    %114 = vmatpush.xpose.msra.mxu0 0.0
    %115 = vmatpush.xpose.msra.mxu0 0.0
    %116 = vmatpush.xpose.msra.mxu0 0.0
    %117 = vmatpush.xpose.msra.mxu0 0.0
    %118 = vmatpush.xpose.msra.mxu0 %v101
    %119 = vmatmul.f32.gmra.mxu0 %v98
    %v120 = vpop.f32.mrf.mxu0
    %v121 = vadd.f32 %v95, %v120
    %122 = vdwg.mxu0
    %vm123 = vcmask 57344
    %124 = vst.msk [vmem:[#allocation5] sm:$0x1] %vm123, %v121
    // Predicated region
    $region14: #{forward.1} parent=1 // pred_check
      _
    $region15: #{forward.1} parent=1 // pred_check_branch
      %126 = sbr.rel (0) target = $region17
    $region16: #{forward.1} parent=1 // pred_region
      %128 = vsyncadd [#allocation4], 0
      %s130 = sshll.u32 [#allocation5], 4
      %s131 = int_to_ptr.vmem [resolvable:$true] %s130
      %s132 = sshll.u32 %s2, 4
      %s133 = int_to_ptr.hbm [resolvable:$true] %s132
      %135 = dma.vmem_to_hbm [thread:$0]  %s131, 16, %s133, [#allocation4]
    $region17: #{forward.1} parent=1 // pred_fallthru
      _
    // Predicated region
    $region18: #{forward.1} parent=1 // pred_check
      _
    $region19: #{forward.1} parent=1 // pred_check_branch
      %137 = sbr.rel (0) target = $region21
    $region20: #{forward.1} parent=1 // pred_region
      %139 = dma.done [#allocation4], 16
    $region21: #{forward.1} parent=1 // pred_fallthru
      _
    %140 = vsyncpa [#allocation3], 1
    %141 = vsyncpa [#allocation4], 1

</llo_original>
